<compile_context>
chip_gen: v6e
topology: v6e:2x2x1
jax: 0.10.0
libtpu: 0.0.40
codegen_flags: <defaults>
</compile_context>

<pallas_src>
import functools

import jax
import jax.numpy as jnp
from jax import lax
from jax.experimental import pallas as pl
from jax.experimental.pallas import tpu as pltpu


def _round_up(n, m):
    return ((n + m - 1) // m) * m


def _choose_tm(n, c, in_itemsize):
    """Largest row tile that keeps the per-step working set ~8 MiB.

    Working set ≈ 2 double-buffered input blocks (tm*C*itemsize each) plus
    ~4 f32 (tm, C) in-kernel temporaries (x_f32, e, iota, select).  8 MiB
    leaves ample headroom under the 32 MiB scoped VMEM we request, even on
    v7x (64 MiB physical VMEM per TensorCore).
    """
    budget = 8 * 1024 * 1024
    bytes_per_row = c * (2 * in_itemsize + 4 * 4)
    tm = budget // max(bytes_per_row, 1)
    tm = int(min(1024, max(8, tm)))
    tm -= tm % 8
    # Never tile wider than the (8-padded) problem: small inputs run as one
    # grid step with no pipeline / accumulator-revisit overhead.
    tm = min(tm, _round_up(n, 8))
    return max(tm, 8)


def _focal_loss_kernel(x_ref, tgt_ref, out_ref, acc_ref, *, gamma, eps):
    """Processes a (tm, C) row tile.

    x_ref  : (tm, C) logits (any float dtype; cast to f32 in-kernel)
    tgt_ref: (tm, 1) int32 class indices (-1 => padded / invalid row)
    out_ref: (1, 1) f32 scalar loss in SMEM (written once, at the last step)
    acc_ref: (tm, 1) f32 VMEM accumulator scratch
    """
    i = pl.program_id(0)
    nsteps = pl.num_programs(0)

    @pl.when(i == 0)
    def _():
        acc_ref[...] = jnp.zeros_like(acc_ref)

    x = x_ref[...].astype(jnp.float32)          # (tm, C)
    tgt = tgt_ref[...]                          # (tm, 1) int32
    tm, c = x.shape

    # Numerically-stable softmax denominator.  This full-tile exp is the only
    # O(tm*C) transcendental in the kernel.
    m = jnp.max(x, axis=-1, keepdims=True)      # (tm, 1)
    e = jnp.exp(x - m)                          # (tm, C)
    denom = jnp.sum(e, axis=-1, keepdims=True)  # (tm, 1)

    # Select the target column's unnormalized probability via an iota/compare
    # (one-hot without a scatter).  Because y is one-hot, only this column
    # contributes to the loss.
    col = lax.broadcasted_iota(jnp.int32, (tm, c), 1)
    e_t = jnp.sum(jnp.where(col == tgt, e, 0.0), axis=-1, keepdims=True)  # (tm,1)

    # Rows whose target is out of range (incl. padded rows with tgt = -1)
    # contribute 0, matching one_hot semantics.
    valid = jnp.logical_and(tgt >= 0, tgt < c).astype(jnp.float32)        # (tm,1)

    # Per-row focal term on (tm, 1) only: divide / clip / log / pow shrink by
    # a factor of C compared with applying them to the whole tile.
    p_t = jnp.clip(e_t / denom, eps, 1.0 - eps)
    loss_rows = -jnp.log(p_t)
    if gamma:
        if float(gamma).is_integer():
            # integer_pow -> VPU multiplies (no EUP exp/log pair).
            loss_rows = loss_rows * (1.0 - p_t) ** int(gamma)
        else:
            loss_rows = loss_rows * (1.0 - p_t) ** float(gamma)
    loss_rows = loss_rows * valid

    # Pure VPU add each step; the expensive cross-sublane reduce and the
    # SMEM scalar write happen exactly once, at the final step.
    acc_ref[...] += loss_rows

    @pl.when(i == nsteps - 1)
    def _():
        out_ref[0, 0] = jnp.sum(acc_ref[...])


def focal_loss_with_one_hot(x, target, gamma=0, eps=1e-7, tm=None,
                            vmem_limit_bytes=32 * 1024 * 1024):
    """x: (N, C) float (f32 or bf16), target: (N,) int class indices -> scalar f32."""
    n, c = x.shape
    if tm is None:
        tm = _choose_tm(n, c, jnp.dtype(x.dtype).itemsize)
    tm = max(8, (int(tm) // 8) * 8)

    # Pad ragged row counts; padded rows get target = -1 => exactly zero loss.
    n_pad = _round_up(n, tm)
    tgt2d = target.astype(jnp.int32).reshape(n, 1)
    if n_pad != n:
        x = jnp.pad(x, ((0, n_pad - n), (0, 0)))
        tgt2d = jnp.pad(tgt2d, ((0, n_pad - n), (0, 0)), constant_values=-1)

    kernel = functools.partial(_focal_loss_kernel, gamma=gamma, eps=eps)
    out = pl.pallas_call(
        kernel,
        out_shape=jax.ShapeDtypeStruct((1, 1), jnp.float32),
        grid=(n_pad // tm,),
        in_specs=[
            pl.BlockSpec((tm, c), lambda i: (i, 0)),   # logits tile
            pl.BlockSpec((tm, 1), lambda i: (i, 0)),   # targets tile
        ],
        # Scalar result lives in SMEM for the whole call; the running partial
        # lives in a VMEM scratch that is resident across the grid, so the
        # grid axis must be sequential.
        # TODO(synk): emit per-tile partial sums as a lane-dense output with a
        # "parallel" grid axis to use both TensorCores on v7x.
        out_specs=pl.BlockSpec(memory_space=pltpu.MemorySpace.SMEM),
        scratch_shapes=[pltpu.VMEM((tm, 1), jnp.float32)],
        compiler_params=pltpu.CompilerParams(
            dimension_semantics=("arbitrary",),
            vmem_limit_bytes=vmem_limit_bytes,
        ),
    )(x, tgt2d)
    return out[0, 0]


def _reference(x, target, gamma, eps):
    logit = jax.nn.softmax(x.astype(jnp.float32), axis=-1)
    logit = jnp.clip(logit, eps, 1.0 - eps)
    y = jax.nn.one_hot(target, x.shape[-1], dtype=jnp.float32)
    return jnp.sum(-y * jnp.log(logit) * (1.0 - logit) ** gamma)


if __name__ == "__main__":
    key = jax.random.PRNGKey(0)
    k1, k2, k3, k4 = jax.random.split(key, 4)

    eps = 1e-7

    # Small shapes consistent with the module: (batch, num_classes).
    N, C = 64, 32
    x = jax.random.normal(k1, (N, C), dtype=jnp.float32)
    target = jax.random.randint(k2, (N,), 0, C, dtype=jnp.int32)

    # gamma=0 is the module default; gamma=2 exercises the focal (integer_pow)
    # term; gamma=2.5 exercises the float-pow fallback.
    for gamma in (0, 2, 2.5):
        out = focal_loss_with_one_hot(x, target, gamma=gamma, eps=eps)
        out = jax.block_until_ready(out)
        ref = _reference(x, target, gamma, eps)
        assert jnp.allclose(out, ref, rtol=1e-5, atol=1e-4), (gamma, out, ref)

    # Ragged row count (exercises the padding + invalid-target masking path).
    N2 = 37
    x2 = jax.random.normal(k3, (N2, C), dtype=jnp.float32)
    t2 = jax.random.randint(k4, (N2,), 0, C, dtype=jnp.int32)
    out2 = jax.block_until_ready(focal_loss_with_one_hot(x2, t2, gamma=2, eps=eps))
    ref2 = _reference(x2, t2, 2, eps)
    assert jnp.allclose(out2, ref2, rtol=1e-5, atol=1e-4), (out2, ref2)

    # bf16 input accepted at the boundary; softmax math stays f32 in-kernel.
    xb = x.astype(jnp.bfloat16)
    outb = jax.block_until_ready(focal_loss_with_one_hot(xb, target, gamma=2, eps=eps))
    refb = _reference(xb, target, 2, eps)
    assert jnp.allclose(outb, refb, rtol=1e-5, atol=1e-3), (outb, refb)

    print("KERNEL_OK")
</pallas_src>

<mosaic_0001>
module attributes {stable_mosaic.version = 11 : i64} {
  func.func @_focal_loss_kernel(%arg0: i32, %arg1: memref<64x32xf32, #tpu.memory_space<vmem>>, %arg2: memref<64x1xi32, #tpu.memory_space<vmem>>, %arg3: memref<1x1xf32, #tpu.memory_space<smem>>, %arg4: memref<64x1xf32, #tpu.memory_space<vmem>>) attributes {dimension_semantics = [#tpu.dimension_semantics<arbitrary>], iteration_bounds = array<i64: 1>, scalar_prefetch = 0 : i64, scratch_operands = 1 : i64, tpu.core_type = #tpu.core_type<tc>, window_params = [{transform_indices = @transform_0, window_bounds = array<i64: 64, 32>}, {transform_indices = @transform_1, window_bounds = array<i64: 64, 1>}, {transform_indices = @transform_2, window_bounds = array<i64: 1, 1>}]} {
    %c0_i32 = arith.constant 0 : i32
    %0 = arith.cmpi eq, %arg0, %c0_i32 : i32
    %1 = arith.extui %0 : i1 to i32
    %c0_i32_0 = arith.constant 0 : i32
    %2 = arith.cmpi ne, %1, %c0_i32_0 : i32
    scf.if %2 {
      %cst_17 = arith.constant 0.000000e+00 : f32
      %41 = vector.broadcast %cst_17 : f32 to vector<64x1xf32>
      %c0_18 = arith.constant 0 : index
      %c0_19 = arith.constant 0 : index
      %42 = vector.load %arg4[%c0_18, %c0_19] : memref<64x1xf32, #tpu.memory_space<vmem>>, vector<64x1xf32>
      tpu.vector_store %arg4[%c0_18, %c0_19], %41 {strides = array<i32>} : memref<64x1xf32, #tpu.memory_space<vmem>>, vector<64x1xf32>,
    } else {
    }
    %c0 = arith.constant 0 : index
    %c0_1 = arith.constant 0 : index
    %3 = vector.load %arg1[%c0, %c0_1] : memref<64x32xf32, #tpu.memory_space<vmem>>, vector<64x32xf32>
    %c0_2 = arith.constant 0 : index
    %c0_3 = arith.constant 0 : index
    %4 = vector.load %arg2[%c0_2, %c0_3] : memref<64x1xi32, #tpu.memory_space<vmem>>, vector<64x1xi32>
    %cst = arith.constant dense<0xFF800000> : vector<64xf32>
    %5 = vector.multi_reduction <maximumf>, %3, %cst [1] : vector<64x32xf32> to vector<64xf32>
    %6 = vector.shape_cast %5 : vector<64xf32> to vector<64x1xf32>
    %7 = vector.broadcast %6 : vector<64x1xf32> to vector<64x32xf32>
    %8 = arith.subf %3, %7 : vector<64x32xf32>
    %9 = math.exp %8 : vector<64x32xf32>
    %cst_4 = arith.constant dense<0.000000e+00> : vector<64xf32>
    %10 = vector.multi_reduction <add>, %9, %cst_4 [1] : vector<64x32xf32> to vector<64xf32>
    %11 = vector.shape_cast %10 : vector<64xf32> to vector<64x1xf32>
    %12 = tpu.iota {dimensions = array<i32: 1>} : vector<64x32xi32>
    %13 = vector.broadcast %4 : vector<64x1xi32> to vector<64x32xi32>
    %14 = arith.cmpi eq, %12, %13 : vector<64x32xi32>
    %cst_5 = arith.constant 0.000000e+00 : f32
    %15 = vector.broadcast %cst_5 : f32 to vector<64x32xf32>
    %16 = arith.select %14, %9, %15 : vector<64x32xi1>, vector<64x32xf32>
    %cst_6 = arith.constant dense<0.000000e+00> : vector<64xf32>
    %17 = vector.multi_reduction <add>, %16, %cst_6 [1] : vector<64x32xf32> to vector<64xf32>
    %18 = vector.shape_cast %17 : vector<64xf32> to vector<64x1xf32>
    %c0_i32_7 = arith.constant 0 : i32
    %19 = vector.broadcast %c0_i32_7 : i32 to vector<64x1xi32>
    %20 = arith.cmpi sge, %4, %19 : vector<64x1xi32>
    %c32_i32 = arith.constant 32 : i32
    %21 = vector.broadcast %c32_i32 : i32 to vector<64x1xi32>
    %22 = arith.cmpi slt, %4, %21 : vector<64x1xi32>
    %23 = arith.andi %20, %22 : vector<64x1xi1>
    %24 = arith.extui %23 : vector<64x1xi1> to vector<64x1xi32>
    %25 = arith.sitofp %24 : vector<64x1xi32> to vector<64x1xf32>
    %26 = arith.divf %18, %11 : vector<64x1xf32>
    %cst_8 = arith.constant 1.000000e-07 : f32
    %cst_9 = arith.constant 0.99999988 : f32
    %27 = vector.broadcast %cst_8 : f32 to vector<64x1xf32>
    %28 = arith.maximumf %27, %26 : vector<64x1xf32>
    %29 = vector.broadcast %cst_9 : f32 to vector<64x1xf32>
    %30 = arith.minimumf %29, %28 : vector<64x1xf32>
    %31 = math.log %30 : vector<64x1xf32>
    %cst_10 = arith.constant 0.000000e+00 : f32
    %32 = vector.broadcast %cst_10 : f32 to vector<64x1xf32>
    %33 = arith.subf %32, %31 : vector<64x1xf32>
    %34 = arith.mulf %33, %25 : vector<64x1xf32>
    %c0_11 = arith.constant 0 : index
    %c0_12 = arith.constant 0 : index
    %35 = vector.load %arg4[%c0_11, %c0_12] : memref<64x1xf32, #tpu.memory_space<vmem>>, vector<64x1xf32>
    %36 = arith.addf %35, %34 : vector<64x1xf32>
    %c0_13 = arith.constant 0 : index
    %c0_14 = arith.constant 0 : index
    %37 = vector.load %arg4[%c0_13, %c0_14] : memref<64x1xf32, #tpu.memory_space<vmem>>, vector<64x1xf32>
    tpu.vector_store %arg4[%c0_13, %c0_14], %36 {strides = array<i32>} : memref<64x1xf32, #tpu.memory_space<vmem>>, vector<64x1xf32>,
    %c0_i32_15 = arith.constant 0 : i32
    %38 = arith.cmpi eq, %arg0, %c0_i32_15 : i32
    %39 = arith.extui %38 : i1 to i32
    %c0_i32_16 = arith.constant 0 : i32
    %40 = arith.cmpi ne, %39, %c0_i32_16 : i32
    scf.if %40 {
      %c0_17 = arith.constant 0 : index
      %c0_18 = arith.constant 0 : index
      %41 = vector.load %arg4[%c0_17, %c0_18] : memref<64x1xf32, #tpu.memory_space<vmem>>, vector<64x1xf32>
      %42 = vector.shape_cast %41 : vector<64x1xf32> to vector<1x64x1xf32>
      %cst_19 = arith.constant dense<0.000000e+00> : vector<1xf32>
      %43 = vector.multi_reduction <add>, %42, %cst_19 [1, 2] : vector<1x64x1xf32> to vector<1xf32>
      %44 = vector.shape_cast %43 : vector<1xf32> to vector<1x1x1xf32>
      %45 = vector.extract %44[0, 0, 0] : f32 from vector<1x1x1xf32>
      %c0_20 = arith.constant 0 : index
      %c0_21 = arith.constant 0 : index
      %46 = memref.load %arg3[%c0_20, %c0_21] : memref<1x1xf32, #tpu.memory_space<smem>>
      memref.store %45, %arg3[%c0_20, %c0_21] : memref<1x1xf32, #tpu.memory_space<smem>>
    } else {
    }
    return
  }
  func.func @transform_0(%arg0: i32) -> (i32, i32) {
    %c0_i32 = arith.constant 0 : i32
    %c0_i32_0 = arith.constant 0 : i32
    return %arg0, %c0_i32 : i32, i32
  }
  func.func @transform_1(%arg0: i32) -> (i32, i32) {
    %c0_i32 = arith.constant 0 : i32
    %c0_i32_0 = arith.constant 0 : i32
    return %arg0, %c0_i32 : i32, i32
  }
  func.func @transform_2(%arg0: i32) -> (i32, i32) {
    %c0_i32 = arith.constant 0 : i32
    %c0_i32_0 = arith.constant 0 : i32
    %c0_i32_1 = arith.constant 0 : i32
    return %c0_i32, %c0_i32_0 : i32, i32
  }
}

</mosaic_0001>

<llo_original>
// kernel: tpu_custom_call.1
$region0: #{tpu_custom_call.1}
  #allocation0 [shape = 'u32[]', space=smem, size = 0x4, offset = 0x4, fixed_abs, tag = 'smem constant byte address 0x4 - core index']
  #allocation1 [shape = 'u32[144,128]{1,0:T(1,128)}', space=vmem, size = 0x12000, scoped, tag = 'internal scratch']
  #allocation2 [shape = 'f32[64,1]{1,0:T(8,128)}', space=vmem, size = 0x8000, scoped, tag = 'scratch operand']
  %s0 = inlined_call_operand.vmem [shape: f32[64,32], index: 0, kind: input, shape index: {}]
  %s1 = inlined_call_operand.vmem [shape: s32[64,1], index: 1, kind: input, shape index: {}]
  %s2 = inlined_call_operand.hbm [shape: f32[1,1], index: 2, kind: output, shape index: {}]
  %s3 = sld [smem:[#allocation0]]
  $region26: #{tpu_custom_call.1} parent=0
    _
  %s5 = ssub.s32 1, %s3
  %s6 = scalar_select 0, %s5, %s3
  $region1: #{tpu_custom_call.1} parent=0
    #allocation3 [shape = 'u8[512]{0}', space=smem, size = 0x200, scoped, tag = 'output window, operand 0, single buffered']
    #allocation4 [shape = 's32[1]{0}', space=sflag, size = 0x4, scoped, tag = 'scoped memory for tpu_custom_call.1']
    %7 = vsyncpa [#allocation4], 0
    // Predicated region
    $region2: #{tpu_custom_call.1} parent=1 // pred_check
      _
    $region3: #{tpu_custom_call.1} parent=1 // pred_check_branch
      %9 = sbr.rel (0) target = $region5
    $region4: #{tpu_custom_call.1} parent=1 // pred_region
      _
    $region5: #{tpu_custom_call.1} parent=1 // pred_fallthru
      _
    // Predicated region
    $region6: #{tpu_custom_call.1} parent=1 // pred_check
      _
    $region7: #{tpu_custom_call.1} parent=1 // pred_check_branch
      %11 = sbr.rel (0) target = $region9
    $region8: #{tpu_custom_call.1} parent=1 // pred_region
      _
    $region9: #{tpu_custom_call.1} parent=1 // pred_fallthru
      _
    %p12 = scmp.eq.s32.totalorder 0, 0
    // Predicated region
    $region10: #{tpu_custom_call.1} parent=1 // pred_check
      %p13 = pneg %p12
    $region11: #{tpu_custom_call.1} parent=1 // pred_check_branch
      %15 = sbr.rel (%p13) target = $region13
    $region12: #{tpu_custom_call.1} parent=1 // pred_region
      %vm16 = vcmask 7168
      %17 = vst.msk [vmem:[#allocation2] sm:$0xff] %vm16, 0.0
      %18 = vst.msk [vmem:[#allocation2 + $0x8] sm:$0xff] %vm16, 0.0
      %19 = vst.msk [vmem:[#allocation2 + $0x10] sm:$0xff] %vm16, 0.0
      %20 = vst.msk [vmem:[#allocation2 + $0x18] sm:$0xff] %vm16, 0.0
      %21 = vst.msk [vmem:[#allocation2 + $0x20] sm:$0xff] %vm16, 0.0
      %22 = vst.msk [vmem:[#allocation2 + $0x28] sm:$0xff] %vm16, 0.0
      %23 = vst.msk [vmem:[#allocation2 + $0x30] sm:$0xff] %vm16, 0.0
      %24 = vst.msk [vmem:[#allocation2 + $0x38] sm:$0xff] %vm16, 0.0
    $region13: #{tpu_custom_call.1} parent=1 // pred_fallthru
      _
    %v25 = vld [vmem:[%s0] sm:$0xff]
    %v26 = vld [vmem:[%s0 + $0x8] sm:$0xff]
    %v27 = vld [vmem:[%s0 + $0x10] sm:$0xff]
    %v28 = vld [vmem:[%s0 + $0x18] sm:$0xff]
    %v29 = vld [vmem:[%s0 + $0x20] sm:$0xff]
    %v30 = vld [vmem:[%s0 + $0x28] sm:$0xff]
    %v31 = vld [vmem:[%s0 + $0x30] sm:$0xff]
    %v32 = vld [vmem:[%s0 + $0x38] sm:$0xff]
    %v33 = vld [vmem:[%s1] sm:$0xff]
    %v34 = vld [vmem:[%s1 + $0x8] sm:$0xff]
    %v35 = vld [vmem:[%s1 + $0x10] sm:$0xff]
    %v36 = vld [vmem:[%s1 + $0x18] sm:$0xff]
    %v37 = vld [vmem:[%s1 + $0x20] sm:$0xff]
    %v38 = vld [vmem:[%s1 + $0x28] sm:$0xff]
    %v39 = vld [vmem:[%s1 + $0x30] sm:$0xff]
    %v40 = vld [vmem:[%s1 + $0x38] sm:$0xff]
    %vm41 = vcmask 261120
    %v42 = vsel %vm41, %v25, -inf
    %43 = vmax.xlane.f32.xlu0 %v42
    %v44 = vpop.xlane.xlu0 %43
    %v45 = vsel %vm41, %v26, -inf
    %46 = vmax.xlane.f32.xlu0 %v45
    %v47 = vpop.xlane.xlu0 %46
    %v48 = vsel %vm41, %v27, -inf
    %49 = vmax.xlane.f32.xlu0 %v48
    %v50 = vpop.xlane.xlu0 %49
    %v51 = vsel %vm41, %v28, -inf
    %52 = vmax.xlane.f32.xlu0 %v51
    %v53 = vpop.xlane.xlu0 %52
    %v54 = vsel %vm41, %v29, -inf
    %55 = vmax.xlane.f32.xlu0 %v54
    %v56 = vpop.xlane.xlu0 %55
    %v57 = vsel %vm41, %v30, -inf
    %58 = vmax.xlane.f32.xlu0 %v57
    %v59 = vpop.xlane.xlu0 %58
    %v60 = vsel %vm41, %v31, -inf
    %61 = vmax.xlane.f32.xlu0 %v60
    %v62 = vpop.xlane.xlu0 %61
    %v63 = vsel %vm41, %v32, -inf
    %64 = vmax.xlane.f32.xlu0 %v63
    %v65 = vpop.xlane.xlu0 %64
    %v66 = vsub.f32 %v25, %v44
    %v67 = vsub.f32 %v26, %v47
    %v68 = vsub.f32 %v27, %v50
    %v69 = vsub.f32 %v28, %v53
    %v70 = vsub.f32 %v29, %v56
    %v71 = vsub.f32 %v30, %v59
    %v72 = vsub.f32 %v31, %v62
    %v73 = vsub.f32 %v32, %v65
    %v74 = vmul.f32 %v66, 1.442695
    %v75 = vpow.pop %v74
    %v76 = vmul.f32 %v67, 1.442695
    %v77 = vpow.pop %v76
    %v78 = vmul.f32 %v68, 1.442695
    %v79 = vpow.pop %v78
    %v80 = vmul.f32 %v69, 1.442695
    %v81 = vpow.pop %v80
    %v82 = vmul.f32 %v70, 1.442695
    %v83 = vpow.pop %v82
    %v84 = vmul.f32 %v71, 1.442695
    %v85 = vpow.pop %v84
    %v86 = vmul.f32 %v72, 1.442695
    %v87 = vpow.pop %v86
    %v88 = vmul.f32 %v73, 1.442695
    %v89 = vpow.pop %v88
    %v90 = vsel %vm41, %v75, 0.0
    %91 = vadd.xlane.f32.xlu0 %v90
    %v92 = vpop.xlane.xlu0 %91
    %v93 = vsel %vm41, %v77, 0.0
    %94 = vadd.xlane.f32.xlu0 %v93
    %v95 = vpop.xlane.xlu0 %94
    %v96 = vsel %vm41, %v79, 0.0
    %97 = vadd.xlane.f32.xlu0 %v96
    %v98 = vpop.xlane.xlu0 %97
    %v99 = vsel %vm41, %v81, 0.0
    %100 = vadd.xlane.f32.xlu0 %v99
    %v101 = vpop.xlane.xlu0 %100
    %v102 = vsel %vm41, %v83, 0.0
    %103 = vadd.xlane.f32.xlu0 %v102
    %v104 = vpop.xlane.xlu0 %103
    %v105 = vsel %vm41, %v85, 0.0
    %106 = vadd.xlane.f32.xlu0 %v105
    %v107 = vpop.xlane.xlu0 %106
    %v108 = vsel %vm41, %v87, 0.0
    %109 = vadd.xlane.f32.xlu0 %v108
    %v110 = vpop.xlane.xlu0 %109
    %v111 = vsel %vm41, %v89, 0.0
    %112 = vadd.xlane.f32.xlu0 %v111
    %v113 = vpop.xlane.xlu0 %112
    %v114 = vlaneseq
    %v115 = vand.u32 %v114, 127
    %116 = vset.pattern.permute.xlu0 0
    %117 = vperm.xlu0 %116, %v33
    %v118 = vpop.permute.xlu0 %117
    %119 = vset.pattern.permute.xlu0 0
    %120 = vperm.xlu0 %119, %v34
    %v121 = vpop.permute.xlu0 %120
    %122 = vset.pattern.permute.xlu0 0
    %123 = vperm.xlu0 %122, %v35
    %v124 = vpop.permute.xlu0 %123
    %125 = vset.pattern.permute.xlu0 0
    %126 = vperm.xlu0 %125, %v36
    %v127 = vpop.permute.xlu0 %126
    %128 = vset.pattern.permute.xlu0 0
    %129 = vperm.xlu0 %128, %v37
    %v130 = vpop.permute.xlu0 %129
    %131 = vset.pattern.permute.xlu0 0
    %132 = vperm.xlu0 %131, %v38
    %v133 = vpop.permute.xlu0 %132
    %134 = vset.pattern.permute.xlu0 0
    %135 = vperm.xlu0 %134, %v39
    %v136 = vpop.permute.xlu0 %135
    %137 = vset.pattern.permute.xlu0 0
    %138 = vperm.xlu0 %137, %v40
    %v139 = vpop.permute.xlu0 %138
    %vm140 = vcmp.eq.s32.totalorder %v115, %v118
    %vm141 = vcmp.eq.s32.totalorder %v115, %v121
    %vm142 = vcmp.eq.s32.totalorder %v115, %v124
    %vm143 = vcmp.eq.s32.totalorder %v115, %v127
    %vm144 = vcmp.eq.s32.totalorder %v115, %v130
    %vm145 = vcmp.eq.s32.totalorder %v115, %v133
    %vm146 = vcmp.eq.s32.totalorder %v115, %v136
    %vm147 = vcmp.eq.s32.totalorder %v115, %v139
    %v148 = vsel %vm140, %v75, 0.0
    %v149 = vsel %vm141, %v77, 0.0
    %v150 = vsel %vm142, %v79, 0.0
    %v151 = vsel %vm143, %v81, 0.0
    %v152 = vsel %vm144, %v83, 0.0
    %v153 = vsel %vm145, %v85, 0.0
    %v154 = vsel %vm146, %v87, 0.0
    %v155 = vsel %vm147, %v89, 0.0
    %v156 = vsel %vm41, %v148, 0.0
    %157 = vadd.xlane.f32.xlu0 %v156
    %v158 = vpop.xlane.xlu0 %157
    %v159 = vsel %vm41, %v149, 0.0
    %160 = vadd.xlane.f32.xlu0 %v159
    %v161 = vpop.xlane.xlu0 %160
    %v162 = vsel %vm41, %v150, 0.0
    %163 = vadd.xlane.f32.xlu0 %v162
    %v164 = vpop.xlane.xlu0 %163
    %v165 = vsel %vm41, %v151, 0.0
    %166 = vadd.xlane.f32.xlu0 %v165
    %v167 = vpop.xlane.xlu0 %166
    %v168 = vsel %vm41, %v152, 0.0
    %169 = vadd.xlane.f32.xlu0 %v168
    %v170 = vpop.xlane.xlu0 %169
    %v171 = vsel %vm41, %v153, 0.0
    %172 = vadd.xlane.f32.xlu0 %v171
    %v173 = vpop.xlane.xlu0 %172
    %v174 = vsel %vm41, %v154, 0.0
    %175 = vadd.xlane.f32.xlu0 %v174
    %v176 = vpop.xlane.xlu0 %175
    %v177 = vsel %vm41, %v155, 0.0
    %178 = vadd.xlane.f32.xlu0 %v177
    %v179 = vpop.xlane.xlu0 %178
    %vm180 = vcmp.ge.s32.totalorder %v33, 0
    %vm181 = vcmp.ge.s32.totalorder %v34, 0
    %vm182 = vcmp.ge.s32.totalorder %v35, 0
    %vm183 = vcmp.ge.s32.totalorder %v36, 0
    %vm184 = vcmp.ge.s32.totalorder %v37, 0
    %vm185 = vcmp.ge.s32.totalorder %v38, 0
    %vm186 = vcmp.ge.s32.totalorder %v39, 0
    %vm187 = vcmp.ge.s32.totalorder %v40, 0
    %vm188 = vcmp.lt.s32.totalorder %v33, 32
    %vm189 = vcmp.lt.s32.totalorder %v34, 32
    %vm190 = vcmp.lt.s32.totalorder %v35, 32
    %vm191 = vcmp.lt.s32.totalorder %v36, 32
    %vm192 = vcmp.lt.s32.totalorder %v37, 32
    %vm193 = vcmp.lt.s32.totalorder %v38, 32
    %vm194 = vcmp.lt.s32.totalorder %v39, 32
    %vm195 = vcmp.lt.s32.totalorder %v40, 32
    %vm196 = vmand %vm180, %vm188
    %vm197 = vmand %vm181, %vm189
    %vm198 = vmand %vm182, %vm190
    %vm199 = vmand %vm183, %vm191
    %vm200 = vmand %vm184, %vm192
    %vm201 = vmand %vm185, %vm193
    %vm202 = vmand %vm186, %vm194
    %vm203 = vmand %vm187, %vm195
    %v204 = vsel %vm196, 1, 0
    %v205 = vsel %vm197, 1, 0
    %v206 = vsel %vm198, 1, 0
    %v207 = vsel %vm199, 1, 0
    %v208 = vsel %vm200, 1, 0
    %v209 = vsel %vm201, 1, 0
    %v210 = vsel %vm202, 1, 0
    %v211 = vsel %vm203, 1, 0
    %v212 = vcvt.s32.f32 %v204
    %v213 = vcvt.s32.f32 %v205
    %v214 = vcvt.s32.f32 %v206
    %v215 = vcvt.s32.f32 %v207
    %v216 = vcvt.s32.f32 %v208
    %v217 = vcvt.s32.f32 %v209
    %v218 = vcvt.s32.f32 %v210
    %v219 = vcvt.s32.f32 %v211
    %v220 = vrcp.pop %v92
    %v221 = vmul.f32 %v158, %v220
    %v222 = vrcp.pop %v95
    %v223 = vmul.f32 %v161, %v222
    %v224 = vrcp.pop %v98
    %v225 = vmul.f32 %v164, %v224
    %v226 = vrcp.pop %v101
    %v227 = vmul.f32 %v167, %v226
    %v228 = vrcp.pop %v104
    %v229 = vmul.f32 %v170, %v228
    %v230 = vrcp.pop %v107
    %v231 = vmul.f32 %v173, %v230
    %v232 = vrcp.pop %v110
    %v233 = vmul.f32 %v176, %v232
    %v234 = vrcp.pop %v113
    %v235 = vmul.f32 %v179, %v234
    %v236 = vmax.f32 %v221, 1e-07
    %v237 = vmax.f32 %v223, 1e-07
    %v238 = vmax.f32 %v225, 1e-07
    %v239 = vmax.f32 %v227, 1e-07
    %v240 = vmax.f32 %v229, 1e-07
    %v241 = vmax.f32 %v231, 1e-07
    %v242 = vmax.f32 %v233, 1e-07
    %v243 = vmax.f32 %v235, 1e-07
    %v244 = vmin.f32 %v236, 0.9999999
    %v245 = vmin.f32 %v237, 0.9999999
    %v246 = vmin.f32 %v238, 0.9999999
    %v247 = vmin.f32 %v239, 0.9999999
    %v248 = vmin.f32 %v240, 0.9999999
    %v249 = vmin.f32 %v241, 0.9999999
    %v250 = vmin.f32 %v242, 0.9999999
    %v251 = vmin.f32 %v243, 0.9999999
    %v252 = vlog2.pop %v244
    %v253 = vmul.f32 %v252, 0.6931472
    %v254 = vlog2.pop %v245
    %v255 = vmul.f32 %v254, 0.6931472
    %v256 = vlog2.pop %v246
    %v257 = vmul.f32 %v256, 0.6931472
    %v258 = vlog2.pop %v247
    %v259 = vmul.f32 %v258, 0.6931472
    %v260 = vlog2.pop %v248
    %v261 = vmul.f32 %v260, 0.6931472
    %v262 = vlog2.pop %v249
    %v263 = vmul.f32 %v262, 0.6931472
    %v264 = vlog2.pop %v250
    %v265 = vmul.f32 %v264, 0.6931472
    %v266 = vlog2.pop %v251
    %v267 = vmul.f32 %v266, 0.6931472
    %v268 = vsub.f32 0.0, %v253
    %v269 = vsub.f32 0.0, %v255
    %v270 = vsub.f32 0.0, %v257
    %v271 = vsub.f32 0.0, %v259
    %v272 = vsub.f32 0.0, %v261
    %v273 = vsub.f32 0.0, %v263
    %v274 = vsub.f32 0.0, %v265
    %v275 = vsub.f32 0.0, %v267
    %v276 = vmul.f32 %v268, %v212
    %v277 = vmul.f32 %v269, %v213
    %v278 = vmul.f32 %v270, %v214
    %v279 = vmul.f32 %v271, %v215
    %v280 = vmul.f32 %v272, %v216
    %v281 = vmul.f32 %v273, %v217
    %v282 = vmul.f32 %v274, %v218
    %v283 = vmul.f32 %v275, %v219
    %v284 = vld [vmem:[#allocation2] sm:$0xff]
    %v285 = vld [vmem:[#allocation2 + $0x8] sm:$0xff]
    %v286 = vld [vmem:[#allocation2 + $0x10] sm:$0xff]
    %v287 = vld [vmem:[#allocation2 + $0x18] sm:$0xff]
    %v288 = vld [vmem:[#allocation2 + $0x20] sm:$0xff]
    %v289 = vld [vmem:[#allocation2 + $0x28] sm:$0xff]
    %v290 = vld [vmem:[#allocation2 + $0x30] sm:$0xff]
    %v291 = vld [vmem:[#allocation2 + $0x38] sm:$0xff]
    %v292 = vadd.f32 %v284, %v276
    %v293 = vadd.f32 %v285, %v277
    %v294 = vadd.f32 %v286, %v278
    %v295 = vadd.f32 %v287, %v279
    %v296 = vadd.f32 %v288, %v280
    %v297 = vadd.f32 %v289, %v281
    %v298 = vadd.f32 %v290, %v282
    %v299 = vadd.f32 %v291, %v283
    %vm300 = vcmask 7168
    %301 = vst.msk [vmem:[#allocation2] sm:$0xff] %vm300, %v292
    %302 = vst.msk [vmem:[#allocation2 + $0x8] sm:$0xff] %vm300, %v293
    %303 = vst.msk [vmem:[#allocation2 + $0x10] sm:$0xff] %vm300, %v294
    %304 = vst.msk [vmem:[#allocation2 + $0x18] sm:$0xff] %vm300, %v295
    %305 = vst.msk [vmem:[#allocation2 + $0x20] sm:$0xff] %vm300, %v296
    %306 = vst.msk [vmem:[#allocation2 + $0x28] sm:$0xff] %vm300, %v297
    %307 = vst.msk [vmem:[#allocation2 + $0x30] sm:$0xff] %vm300, %v298
    %308 = vst.msk [vmem:[#allocation2 + $0x38] sm:$0xff] %vm300, %v299
    // Predicated region
    $region14: #{tpu_custom_call.1} parent=1 // pred_check
      %p309 = pneg %p12
    $region15: #{tpu_custom_call.1} parent=1 // pred_check_branch
      %311 = sbr.rel (%p309) target = $region17
    $region16: #{tpu_custom_call.1} parent=1 // pred_region
      %v312 = vld [vmem:[#allocation2] sm:$0xff]
      %v313 = vld [vmem:[#allocation2 + $0x8] sm:$0xff]
      %v314 = vld [vmem:[#allocation2 + $0x10] sm:$0xff]
      %v315 = vld [vmem:[#allocation2 + $0x18] sm:$0xff]
      %v316 = vld [vmem:[#allocation2 + $0x20] sm:$0xff]
      %v317 = vld [vmem:[#allocation2 + $0x28] sm:$0xff]
      %v318 = vld [vmem:[#allocation2 + $0x30] sm:$0xff]
      %v319 = vld [vmem:[#allocation2 + $0x38] sm:$0xff]
      %v320 = vsel %vm300, %v312, 0.0
      %v321 = vsel %vm300, %v313, 0.0
      %v322 = vadd.f32 %v320, %v321
      %v323 = vsel %vm300, %v314, 0.0
      %v324 = vadd.f32 %v322, %v323
      %v325 = vsel %vm300, %v315, 0.0
      %v326 = vadd.f32 %v324, %v325
      %v327 = vsel %vm300, %v316, 0.0
      %v328 = vadd.f32 %v326, %v327
      %v329 = vsel %vm300, %v317, 0.0
      %v330 = vadd.f32 %v328, %v329
      %v331 = vsel %vm300, %v318, 0.0
      %v332 = vadd.f32 %v330, %v331
      %v333 = vsel %vm300, %v319, 0.0
      %v334 = vadd.f32 %v332, %v333
      %335 = vadd.xlane.f32.xlu0 %v334
      %v336 = vpop.xlane.xlu0 %335
      %v337 = vrot.slane %v336, 4
      %v338 = vadd.f32 %v336, %v337
      %v339 = vrot.slane %v338, 2
      %v340 = vadd.f32 %v338, %v339
      %v341 = vrot.slane %v340, 1
      %v342 = vadd.f32 %v340, %v341
      %s343 = vtos %v342
      %s344 = scalar_lea.smem [#allocation3], 0
      %345 = sst [smem:[%s344]] %s343
    $region17: #{tpu_custom_call.1} parent=1 // pred_fallthru
      _
    // Predicated region
    $region18: #{tpu_custom_call.1} parent=1 // pred_check
      _
    $region19: #{tpu_custom_call.1} parent=1 // pred_check_branch
      %347 = sbr.rel (0) target = $region21
    $region20: #{tpu_custom_call.1} parent=1 // pred_region
      %s349 = ssub.s32 16, 16
      %350 = vsyncadd [#allocation4], %s349
      %353 = dma.smem_to_hbm [#allocation3], 16, %s2, [#allocation4]
    $region21: #{tpu_custom_call.1} parent=1 // pred_fallthru
      _
    // Predicated region
    $region22: #{tpu_custom_call.1} parent=1 // pred_check
      _
    $region23: #{tpu_custom_call.1} parent=1 // pred_check_branch
      %355 = sbr.rel (0) target = $region25
    $region24: #{tpu_custom_call.1} parent=1 // pred_region
      %356 = dma.done [#allocation4], 16
    $region25: #{tpu_custom_call.1} parent=1 // pred_fallthru
      _
    %357 = sfence
    %358 = vsyncpa [#allocation4], 1

</llo_original>
